<compile_context>
chip_gen: v5e
topology: v5e:2x2
jax: 0.10.0
libtpu: 0.0.40
codegen_flags: <defaults>
</compile_context>

<pallas_src>
import functools

import jax
import jax.numpy as jnp
from jax.experimental import pallas as pl
from jax.experimental.pallas import tpu as pltpu


def _emb_kernel(p_ref, w_ref, prm_ref, o_ref, *, eps):
    # p_ref:   (K,  TN)  patch vectors, one column per output position (lanes)
    # w_ref:   (Hd, K)   projection weight (Conv3d weight reshaped, no transpose)
    # prm_ref: (Hd, 3)   columns = [conv bias, LN gamma, LN beta]
    # o_ref:   (Hd, TN)  output tile: channels on sublanes, positions on lanes
    x = jnp.dot(w_ref[...], p_ref[...], preferred_element_type=jnp.float32)

    prm = prm_ref[...].astype(jnp.float32)
    bias = prm[:, 0:1]
    gamma = prm[:, 1:2]
    beta = prm[:, 2:3]

    x = x + bias                                   # conv bias (per channel)

    # LayerNormChannel: normalize over the channel (hidden) axis == sublane axis.
    u = jnp.mean(x, axis=0, keepdims=True)         # (1, TN)  XLU reduction
    d = x - u
    s = jnp.mean(d * d, axis=0, keepdims=True)     # (1, TN)
    xn = d * jax.lax.rsqrt(s + eps)                # rsqrt -> EUP (free slot)
    o_ref[...] = (gamma * xn + beta).astype(o_ref.dtype)


def _vmem_capacity_bytes():
    try:
        return int(pltpu.get_tpu_info().vmem_capacity_bytes)
    except Exception:
        return 64 * 1024 * 1024  # conservative: v7x per-TC VMEM


def _tiling(K, hidden, m_pad, max_tn=4096):
    """Pick the lane tile (multiple of 128, divides m_pad) from the VMEM budget."""
    vmem = _vmem_capacity_bytes()
    budget = vmem // 2                              # leave half for compiler scratch
    resident = 4 * (hidden * K + hidden * 8)        # weight + params block (f32, padded)
    per_lane = 4 * (2 * K + 2 * hidden)             # double-buffered input + output cols
    cap = (budget - resident) // per_lane
    cap = max(cap - cap % 128, 128)
    cap = min(cap, max_tn)

    tn = min(cap, m_pad)
    tn -= tn % 128
    tn = max(tn, 128)
    while m_pad % tn:
        tn -= 128

    usage = resident + per_lane * tn
    vmem_limit = min(max(32 * 1024 * 1024, int(1.25 * usage)), int(0.9 * vmem))
    return tn, vmem_limit


def embeddings_forward(x, conv_w, conv_b, ln_w, ln_b, patch_size, eps=1e-5):
    """x: [B, C_in, D, H, W] (NCDHW).  Returns [B, hidden, D/p, H/p, W/p]."""
    B, C, D, H, W = x.shape
    p = patch_size
    assert D % p == 0 and H % p == 0 and W % p == 0
    hidden = conv_w.shape[0]
    Dp, Hp, Wp = D // p, H // p, W // p
    K = C * p * p * p
    N = Dp * Hp * Wp
    M = B * N                                     # batch folded into position axis
    M_pad = ((M + 127) // 128) * 128              # lane-dense padding

    # --- patch extraction glue (stride == kernel -> pure reshape/transpose) ---
    # (B,C,Dp,p,Hp,p,Wp,p) -> (C,p,p,p, B,Dp,Hp,Wp) -> (K, B*N)
    # K order = (c, kd, kh, kw), matching conv_w.reshape(hidden, K).
    # Materialized once by XLA in HBM so the kernel DMAs row-contiguous tiles.
    xp = x.reshape(B, C, Dp, p, Hp, p, Wp, p)
    xp = jnp.transpose(xp, (1, 3, 5, 7, 0, 2, 4, 6))
    patches = xp.reshape(K, M)
    if M_pad != M:
        patches = jnp.pad(patches, ((0, 0), (0, M_pad - M)))

    w2d = conv_w.reshape(hidden, K)                       # (hidden, K)
    params = jnp.stack([conv_b, ln_w, ln_b], axis=-1)     # (hidden, 3)

    tn, vmem_limit = _tiling(K, hidden, M_pad)
    grid = (M_pad // tn,)

    # TODO(synk): for ViT-scale K*hidden that exceeds the VMEM budget, add a K
    # grid axis marked "arbitrary" with an f32 VMEM accumulator (pl.when
    # init/finalize), tiling K in multiples of 256 (v6e/v7x) / 128 (v5e).
    out = pl.pallas_call(
        functools.partial(_emb_kernel, eps=eps),
        out_shape=jax.ShapeDtypeStruct((hidden, M_pad), x.dtype),
        grid_spec=pltpu.PrefetchScalarGridSpec(
            num_scalar_prefetch=0,
            grid=grid,
            in_specs=[
                pl.BlockSpec((K, tn), lambda m: (0, m)),
                pl.BlockSpec((hidden, K), lambda m: (0, 0)),
                pl.BlockSpec((hidden, 3), lambda m: (0, 0)),
            ],
            out_specs=pl.BlockSpec((hidden, tn), lambda m: (0, m)),
        ),
        compiler_params=pltpu.CompilerParams(
            dimension_semantics=("parallel",),
            vmem_limit_bytes=vmem_limit,
        ),
    )(patches, w2d, params)

    # --- output glue: (hidden, B*N) -> (B, hidden, Dp, Hp, Wp) ---
    out = out[:, :M].reshape(hidden, B, Dp, Hp, Wp)
    return jnp.transpose(out, (1, 0, 2, 3, 4))


def _reference(x, conv_w, conv_b, ln_w, ln_b, patch_size, eps=1e-5):
    """Pure-JAX reference mirroring the PyTorch forward."""
    y = jax.lax.conv_general_dilated(
        x, conv_w,
        window_strides=(patch_size,) * 3,
        padding="VALID",
        dimension_numbers=("NCDHW", "OIDHW", "NCDHW"),
    ) + conv_b.reshape(1, -1, 1, 1, 1)
    u = jnp.mean(y, axis=1, keepdims=True)
    s = jnp.mean((y - u) ** 2, axis=1, keepdims=True)
    yn = (y - u) / jnp.sqrt(s + eps)
    return ln_w.reshape(1, -1, 1, 1, 1) * yn + ln_b.reshape(1, -1, 1, 1, 1)


if __name__ == "__main__":
    # Config: in_channels=4, patch_size=2, hidden_size=32; input [2,4,8,8,8]
    B, C_in, D, H, W = 2, 4, 8, 8, 8
    patch_size = 2
    hidden = 32

    key = jax.random.PRNGKey(0)
    kx, kw, kb = jax.random.split(key, 3)

    x = jax.random.normal(kx, (B, C_in, D, H, W), dtype=jnp.float32)
    conv_w = 0.05 * jax.random.normal(
        kw, (hidden, C_in, patch_size, patch_size, patch_size), dtype=jnp.float32)
    conv_b = 0.01 * jax.random.normal(kb, (hidden,), dtype=jnp.float32)
    ln_w = jnp.ones((hidden,), dtype=jnp.float32)    # LayerNormChannel init
    ln_b = jnp.zeros((hidden,), dtype=jnp.float32)

    out = embeddings_forward(x, conv_w, conv_b, ln_w, ln_b, patch_size)
    out = jax.block_until_ready(out)

    ref = _reference(x, conv_w, conv_b, ln_w, ln_b, patch_size)
    assert out.shape == (B, hidden, D // patch_size, H // patch_size, W // patch_size)
    assert jnp.allclose(out, ref, atol=1e-4, rtol=1e-4), "mismatch vs reference"

    print("KERNEL_OK")
</pallas_src>

<mosaic_0001>
module attributes {stable_mosaic.version = 11 : i64} {
  func.func @_emb_kernel(%arg0: i32, %arg1: memref<32x128xf32, #tpu.memory_space<vmem>>, %arg2: memref<32x32xf32, #tpu.memory_space<vmem>>, %arg3: memref<32x3xf32, #tpu.memory_space<vmem>>, %arg4: memref<32x128xf32, #tpu.memory_space<vmem>>) attributes {dimension_semantics = [#tpu.dimension_semantics<parallel>], iteration_bounds = array<i64: 1>, scalar_prefetch = 0 : i64, scratch_operands = 0 : i64, tpu.core_type = #tpu.core_type<tc>, window_params = [{transform_indices = @transform_0, window_bounds = array<i64: 32, 128>}, {pipeline_mode = #tpu.pipeline_mode<synchronous>, transform_indices = @transform_1, window_bounds = array<i64: 32, 32>}, {pipeline_mode = #tpu.pipeline_mode<synchronous>, transform_indices = @transform_2, window_bounds = array<i64: 32, 3>}, {transform_indices = @transform_3, window_bounds = array<i64: 32, 128>}]} {
    %c0 = arith.constant 0 : index
    %c0_0 = arith.constant 0 : index
    %0 = vector.load %arg2[%c0, %c0_0] : memref<32x32xf32, #tpu.memory_space<vmem>>, vector<32x32xf32>
    %c0_1 = arith.constant 0 : index
    %c0_2 = arith.constant 0 : index
    %1 = vector.load %arg1[%c0_1, %c0_2] : memref<32x128xf32, #tpu.memory_space<vmem>>, vector<32x128xf32>
    %cst = arith.constant dense<0.000000e+00> : vector<32x128xf32>
    %2 = tpu.matmul %0, %1, %cst {dimension_numbers = #tpu.dot_dimension_numbers<[1], [0], [0], [1], [0, 0, 1, 1], [], []>} : vector<32x32xf32>, vector<32x128xf32>, vector<32x128xf32> -> vector<32x128xf32>
    %c0_3 = arith.constant 0 : index
    %c0_4 = arith.constant 0 : index
    %3 = vector.load %arg3[%c0_3, %c0_4] : memref<32x3xf32, #tpu.memory_space<vmem>>, vector<32x3xf32>
    %4 = vector.extract_strided_slice %3 {offsets = [0, 0], sizes = [32, 1], strides = [1, 1]} : vector<32x3xf32> to vector<32x1xf32>
    %5 = vector.extract_strided_slice %3 {offsets = [0, 1], sizes = [32, 1], strides = [1, 1]} : vector<32x3xf32> to vector<32x1xf32>
    %6 = vector.extract_strided_slice %3 {offsets = [0, 2], sizes = [32, 1], strides = [1, 1]} : vector<32x3xf32> to vector<32x1xf32>
    %7 = vector.broadcast %4 : vector<32x1xf32> to vector<32x128xf32>
    %8 = arith.addf %2, %7 : vector<32x128xf32>
    %cst_5 = arith.constant dense<0.000000e+00> : vector<128xf32>
    %9 = vector.multi_reduction <add>, %8, %cst_5 [0] : vector<32x128xf32> to vector<128xf32>
    %10 = vector.shape_cast %9 : vector<128xf32> to vector<1x128xf32>
    %cst_6 = arith.constant 3.200000e+01 : f32
    %11 = vector.broadcast %cst_6 : f32 to vector<1x128xf32>
    %12 = arith.divf %10, %11 : vector<1x128xf32>
    %13 = vector.broadcast %12 : vector<1x128xf32> to vector<32x128xf32>
    %14 = arith.subf %8, %13 : vector<32x128xf32>
    %15 = arith.mulf %14, %14 : vector<32x128xf32>
    %cst_7 = arith.constant dense<0.000000e+00> : vector<128xf32>
    %16 = vector.multi_reduction <add>, %15, %cst_7 [0] : vector<32x128xf32> to vector<128xf32>
    %17 = vector.shape_cast %16 : vector<128xf32> to vector<1x128xf32>
    %cst_8 = arith.constant 3.200000e+01 : f32
    %18 = vector.broadcast %cst_8 : f32 to vector<1x128xf32>
    %19 = arith.divf %17, %18 : vector<1x128xf32>
    %cst_9 = arith.constant 9.99999974E-6 : f32
    %20 = vector.broadcast %cst_9 : f32 to vector<1x128xf32>
    %21 = arith.addf %19, %20 : vector<1x128xf32>
    %22 = math.rsqrt %21 : vector<1x128xf32>
    %23 = vector.broadcast %22 : vector<1x128xf32> to vector<32x128xf32>
    %24 = arith.mulf %14, %23 : vector<32x128xf32>
    %25 = vector.broadcast %5 : vector<32x1xf32> to vector<32x128xf32>
    %26 = arith.mulf %25, %24 : vector<32x128xf32>
    %27 = vector.broadcast %6 : vector<32x1xf32> to vector<32x128xf32>
    %28 = arith.addf %26, %27 : vector<32x128xf32>
    %c0_10 = arith.constant 0 : index
    %c0_11 = arith.constant 0 : index
    %29 = vector.load %arg4[%c0_10, %c0_11] : memref<32x128xf32, #tpu.memory_space<vmem>>, vector<32x128xf32>
    tpu.vector_store %arg4[%c0_10, %c0_11], %28 {strides = array<i32>} : memref<32x128xf32, #tpu.memory_space<vmem>>, vector<32x128xf32>,
    return
  }
  func.func @transform_0(%arg0: i32) -> (i32, i32) {
    %c0_i32 = arith.constant 0 : i32
    %c0_i32_0 = arith.constant 0 : i32
    return %c0_i32, %arg0 : i32, i32
  }
  func.func @transform_1(%arg0: i32) -> (i32, i32) {
    %c0_i32 = arith.constant 0 : i32
    %c0_i32_0 = arith.constant 0 : i32
    %c0_i32_1 = arith.constant 0 : i32
    return %c0_i32, %c0_i32_0 : i32, i32
  }
  func.func @transform_2(%arg0: i32) -> (i32, i32) {
    %c0_i32 = arith.constant 0 : i32
    %c0_i32_0 = arith.constant 0 : i32
    %c0_i32_1 = arith.constant 0 : i32
    return %c0_i32, %c0_i32_0 : i32, i32
  }
  func.func @transform_3(%arg0: i32) -> (i32, i32) {
    %c0_i32 = arith.constant 0 : i32
    %c0_i32_0 = arith.constant 0 : i32
    return %c0_i32, %arg0 : i32, i32
  }
}

</mosaic_0001>

<llo_original>
// kernel: tpu_custom_call.1
$region0: #{tpu_custom_call.1}
  #allocation0 [shape = 'u32[]', space=smem, size = 0x4, offset = 0x4, fixed_abs, tag = 'smem constant byte address 0x4 - core index']
  #allocation1 [shape = 'u32[72,128]{1,0:T(1,128)}', space=vmem, size = 0x9000, scoped, tag = 'internal scratch']
  %s0 = inlined_call_operand.vmem [shape: f32[32,128], index: 0, kind: input, shape index: {}]
  %s1 = inlined_call_operand.hbm [shape: f32[32,32], index: 1, kind: input, shape index: {}]
  %s2 = inlined_call_operand.vmem [shape: f32[32,3], index: 2, kind: input, shape index: {}]
  %s3 = inlined_call_operand.hbm [shape: f32[32,128], index: 3, kind: output, shape index: {}]
  %s4 = sld [smem:[#allocation0]]
  $region26: #{tpu_custom_call.1} parent=0
    _
  %s6 = ssub.s32 1, %s4
  %s7 = scalar_select 0, %s6, %s4
  $region1: #{tpu_custom_call.1} parent=0
    #allocation2 [shape = 'u8[16384]{0}', space=vmem, size = 0x4000, scoped, tag = 'input window, operand 1, single buffered']
    #allocation3 [shape = 's32[1]{0}', space=sflag, size = 0x4, scoped, tag = 'scoped memory for tpu_custom_call.1']
    #allocation4 [shape = 's32[1]{0}', space=sflag, size = 0x4, scoped, tag = 'scoped memory for tpu_custom_call.1']
    #allocation5 [shape = 'u8[16384]{0}', space=vmem, size = 0x4000, scoped, tag = 'output window, operand 0, single buffered']
    %8 = vsyncpa [#allocation3], 0
    %9 = vsyncpa [#allocation4], 0
    // Predicated region
    $region2: #{tpu_custom_call.1} parent=1 // pred_check
      _
    $region3: #{tpu_custom_call.1} parent=1 // pred_check_branch
      %11 = sbr.rel (0) target = $region5
    $region4: #{tpu_custom_call.1} parent=1 // pred_region
      _
    $region5: #{tpu_custom_call.1} parent=1 // pred_fallthru
      _
    // Predicated region
    $region6: #{tpu_custom_call.1} parent=1 // pred_check
      _
    $region7: #{tpu_custom_call.1} parent=1 // pred_check_branch
      %13 = sbr.rel (0) target = $region9
    $region8: #{tpu_custom_call.1} parent=1 // pred_region
      %15 = vsyncadd [#allocation3], 0
      %s16 = sshll.u32 %s1, 4
      %s17 = int_to_ptr.hbm [resolvable:$true] %s16
      %s18 = sshll.u32 [#allocation2], 4
      %s19 = int_to_ptr.vmem [resolvable:$true] %s18
      %24 = dma.hbm_to_vmem [thread:$0]  %s17, 512, %s19, [#allocation3], 128, 128, 8
    $region9: #{tpu_custom_call.1} parent=1 // pred_fallthru
      _
    // Predicated region
    $region10: #{tpu_custom_call.1} parent=1 // pred_check
      _
    $region11: #{tpu_custom_call.1} parent=1 // pred_check_branch
      %26 = sbr.rel (0) target = $region13
    $region12: #{tpu_custom_call.1} parent=1 // pred_region
      _
    $region13: #{tpu_custom_call.1} parent=1 // pred_fallthru
      _
    // Predicated region
    $region14: #{tpu_custom_call.1} parent=1 // pred_check
      _
    $region15: #{tpu_custom_call.1} parent=1 // pred_check_branch
      %28 = sbr.rel (0) target = $region17
    $region16: #{tpu_custom_call.1} parent=1 // pred_region
      %30 = dma.done [#allocation3], 512
    $region17: #{tpu_custom_call.1} parent=1 // pred_fallthru
      _
    %v31 = vld [vmem:[#allocation2] sm:$0xff]
    %v32 = vld [vmem:[#allocation2 + $0x8] sm:$0xff]
    %v33 = vld [vmem:[#allocation2 + $0x10] sm:$0xff]
    %v34 = vld [vmem:[#allocation2 + $0x18] sm:$0xff]
    %v35 = vld [vmem:[%s0] sm:$0xff]
    %v36 = vld [vmem:[%s0 + $0x8] sm:$0xff]
    %v37 = vld [vmem:[%s0 + $0x10] sm:$0xff]
    %v38 = vld [vmem:[%s0 + $0x18] sm:$0xff]
    %v39 = vld [vmem:[%s2] sm:$0xff]
    %v40 = vld [vmem:[%s2 + $0x8] sm:$0xff]
    %v41 = vld [vmem:[%s2 + $0x10] sm:$0xff]
    %v42 = vld [vmem:[%s2 + $0x18] sm:$0xff]
    %44 = vset.pattern.permute.xlu0 0
    %45 = vperm.xlu0 %44, %v39
    %v46 = vpop.permute.xlu0 %45
    %49 = vset.pattern.permute.xlu0 0
    %50 = vperm.xlu0 %49, %v40
    %v51 = vpop.permute.xlu0 %50
    %54 = vset.pattern.permute.xlu0 0
    %55 = vperm.xlu0 %54, %v41
    %v56 = vpop.permute.xlu0 %55
    %59 = vset.pattern.permute.xlu0 0
    %60 = vperm.xlu0 %59, %v42
    %v61 = vpop.permute.xlu0 %60
    %vm63 = vcmask 261120
    %v65 = vsel %vm63, %v31, 0
    %v68 = vsel %vm63, %v32, 0
    %v71 = vsel %vm63, %v33, 0
    %v74 = vsel %vm63, %v34, 0
    %76 = vmatpush.msra.mxu0 0.0
    %77 = vmatpush.msra.mxu0 0.0
    %78 = vmatpush.msra.mxu0 0.0
    %79 = vmatpush.msra.mxu0 0.0
    %80 = vmatpush.msra.mxu0 0.0
    %81 = vmatpush.msra.mxu0 0.0
    %82 = vmatpush.msra.mxu0 0.0
    %83 = vmatpush.msra.mxu0 0.0
    %84 = vmatpush.msra.mxu0 0.0
    %85 = vmatpush.msra.mxu0 0.0
    %86 = vmatpush.msra.mxu0 0.0
    %87 = vmatpush.msra.mxu0 0.0
    %88 = vmatpush.msra.mxu0 %v38
    %89 = vmatpush.msra.mxu0 %v37
    %90 = vmatpush.msra.mxu0 %v36
    %91 = vmatpush.msra.mxu0 %v35
    %92 = vmatmul.f32.gmra.mxu0 %v65
    %v93 = vpop.f32.mrf.mxu0
    %v94 = vadd.f32 %v46, %v93
    %95 = vmatmul.f32.gmra.mxu0 %v68
    %v96 = vpop.f32.mrf.mxu0
    %v97 = vadd.f32 %v51, %v96
    %98 = vmatmul.f32.gmra.mxu0 %v71
    %v99 = vpop.f32.mrf.mxu0
    %v100 = vadd.f32 %v56, %v99
    %101 = vmatmul.f32.gmra.mxu0 %v74
    %v102 = vpop.f32.mrf.mxu0
    %v103 = vadd.f32 %v61, %v102
    %104 = vdwg.mxu0
    %v105 = vadd.f32 %v94, %v97
    %v106 = vadd.f32 %v105, %v100
    %v107 = vadd.f32 %v106, %v103
    %v108 = vrot.slane %v107, 4
    %v109 = vadd.f32 %v107, %v108
    %v110 = vrot.slane %v109, 2
    %v111 = vadd.f32 %v109, %v110
    %v112 = vrot.slane %v111, 1
    %v113 = vadd.f32 %v111, %v112
    %v114 = vrcp.pop 32.0
    %v115 = vmul.f32 32.0, %v114
    %v116 = vsub.f32 1.0, %v115
    %v117 = vmul.f32 %v114, %v116
    %v118 = vadd.f32 %v114, %v117
    %vm119 = vweird.f32 %v114
    %v120 = vsel %vm119, %v114, %v118
    %v121 = vmul.f32 %v113, %v120
    %v122 = vsub.f32 %v94, %v121
    %v123 = vsub.f32 %v97, %v121
    %v124 = vsub.f32 %v100, %v121
    %v125 = vsub.f32 %v103, %v121
    %v126 = vmul.f32 %v122, %v122
    %v127 = vmul.f32 %v123, %v123
    %v128 = vmul.f32 %v124, %v124
    %v129 = vmul.f32 %v125, %v125
    %v130 = vadd.f32 %v126, %v127
    %v131 = vadd.f32 %v130, %v128
    %v132 = vadd.f32 %v131, %v129
    %v133 = vrot.slane %v132, 4
    %v134 = vadd.f32 %v132, %v133
    %v135 = vrot.slane %v134, 2
    %v136 = vadd.f32 %v134, %v135
    %v137 = vrot.slane %v136, 1
    %v138 = vadd.f32 %v136, %v137
    %v139 = vmul.f32 %v138, %v120
    %v140 = vadd.f32 %v139, 1e-05
    %v141 = vrsqrt.pop %v140
    %v142 = vmul.f32 %v141, %v140
    %v143 = vmul.f32 %v142, %v141
    %v144 = vmul.f32 0.5, %v143
    %v145 = vsub.f32 1.5, %v144
    %v146 = vmul.f32 %v141, %v145
    %vm147 = vweird.f32 %v140
    %vm148 = vweird.f32 %v141
    %vm149 = vmor %vm147, %vm148
    %v150 = vsel %vm149, %v141, %v146
    %v151 = vmul.f32 %v122, %v150
    %v152 = vmul.f32 %v123, %v150
    %v153 = vmul.f32 %v124, %v150
    %v154 = vmul.f32 %v125, %v150
    %155 = vset.pattern.permute.xlu0 1
    %156 = vperm.xlu0 %155, %v39
    %v157 = vpop.permute.xlu0 %156
    %159 = vset.pattern.permute.xlu0 1
    %160 = vperm.xlu0 %159, %v40
    %v161 = vpop.permute.xlu0 %160
    %163 = vset.pattern.permute.xlu0 1
    %164 = vperm.xlu0 %163, %v41
    %v165 = vpop.permute.xlu0 %164
    %167 = vset.pattern.permute.xlu0 1
    %168 = vperm.xlu0 %167, %v42
    %v169 = vpop.permute.xlu0 %168
    %v171 = vmul.f32 %v157, %v151
    %v172 = vmul.f32 %v161, %v152
    %v173 = vmul.f32 %v165, %v153
    %v174 = vmul.f32 %v169, %v154
    %175 = vset.pattern.permute.xlu0 2
    %176 = vperm.xlu0 %175, %v39
    %v177 = vpop.permute.xlu0 %176
    %179 = vset.pattern.permute.xlu0 2
    %180 = vperm.xlu0 %179, %v40
    %v181 = vpop.permute.xlu0 %180
    %183 = vset.pattern.permute.xlu0 2
    %184 = vperm.xlu0 %183, %v41
    %v185 = vpop.permute.xlu0 %184
    %187 = vset.pattern.permute.xlu0 2
    %188 = vperm.xlu0 %187, %v42
    %v189 = vpop.permute.xlu0 %188
    %v191 = vadd.f32 %v171, %v177
    %v192 = vadd.f32 %v172, %v181
    %v193 = vadd.f32 %v173, %v185
    %v194 = vadd.f32 %v174, %v189
    %195 = vst [vmem:[#allocation5] sm:$0xff] %v191
    %196 = vst [vmem:[#allocation5 + $0x8] sm:$0xff] %v192
    %197 = vst [vmem:[#allocation5 + $0x10] sm:$0xff] %v193
    %198 = vst [vmem:[#allocation5 + $0x18] sm:$0xff] %v194
    // Predicated region
    $region18: #{tpu_custom_call.1} parent=1 // pred_check
      _
    $region19: #{tpu_custom_call.1} parent=1 // pred_check_branch
      %200 = sbr.rel (0) target = $region21
    $region20: #{tpu_custom_call.1} parent=1 // pred_region
      %202 = vsyncadd [#allocation4], 0
      %s203 = sshll.u32 [#allocation5], 4
      %s204 = int_to_ptr.vmem [resolvable:$true] %s203
      %s205 = sshll.u32 %s3, 4
      %s206 = int_to_ptr.hbm [resolvable:$true] %s205
      %211 = dma.vmem_to_hbm [thread:$0]  %s204, 512, %s206, [#allocation4], 128, 128, 8
    $region21: #{tpu_custom_call.1} parent=1 // pred_fallthru
      _
    // Predicated region
    $region22: #{tpu_custom_call.1} parent=1 // pred_check
      _
    $region23: #{tpu_custom_call.1} parent=1 // pred_check_branch
      %213 = sbr.rel (0) target = $region25
    $region24: #{tpu_custom_call.1} parent=1 // pred_region
      %215 = dma.done [#allocation4], 512
    $region25: #{tpu_custom_call.1} parent=1 // pred_fallthru
      _
    %216 = vsyncpa [#allocation3], 1
    %217 = vsyncpa [#allocation4], 1

</llo_original>
